<compile_context>
chip_gen: v5e
topology: v5e:2x2
jax: 0.10.0
libtpu: 0.0.40
codegen_flags: <defaults>
</compile_context>

<pallas_src>
import functools

import jax
import jax.numpy as jnp
from jax.experimental import pallas as pl
from jax.experimental.pallas import tpu as pltpu

INPUT_SIZE = 1
HIDDEN_SIZE = 16
OUTPUT_SIZE = 1

# Lane offsets inside the packed parameter slab (shape (HIDDEN_SIZE, _SLAB_COLS)).
_WHH_COL = 0                          # cols [0, 16)  : W_hh (original orientation)
_WIH_COL = HIDDEN_SIZE                # col  16       : W_ih column  (16,)
_BIAS_COL = HIDDEN_SIZE + 1           # col  17       : b_ih + b_hh  (16,)
_H0_COL = HIDDEN_SIZE + 2             # col  18       : initial hidden state (16,)
_WLIN_COL = HIDDEN_SIZE + 3           # cols [19, 35) : W_lin row, stored on sublane 0
_SLAB_COLS = _WLIN_COL + HIDDEN_SIZE  # 35


def rnn_linear_kernel(x_ref, params_ref, b_lin_ref, out_ref, h_out_ref,
                      h_all_ref, *, seq_len):
    """Single-invocation kernel (no grid).

    x_ref      : (1, seq_lanes) f32      -- time on lanes, zero-padded
    params_ref : (16, 35) f32            -- packed parameter slab (VMEM)
    b_lin_ref  : (1,) f32                -- Linear bias scalar (SMEM)
    out_ref    : (1, seq_lanes) f32      -- lane-dense output, time on lanes
    h_out_ref  : (16, 1) f32             -- final hidden state (column)
    h_all_ref  : VMEM (16, seq_lanes)    -- hidden history, time on lanes
    """
    seq_lanes = out_ref.shape[1]

    # ---- parameters: loaded once, resident in vregs for the whole kernel ----
    w_hh = params_ref[:, pl.ds(_WHH_COL, HIDDEN_SIZE)]                  # (16, 16)
    w_ih_col = params_ref[:, pl.ds(_WIH_COL, 1)]                         # (16, 1)
    bias_col = params_ref[:, pl.ds(_BIAS_COL, 1)]                        # (16, 1)
    h0_col = params_ref[:, pl.ds(_H0_COL, 1)]                            # (16, 1)
    w_lin_row = params_ref[pl.ds(0, 1), pl.ds(_WLIN_COL, HIDDEN_SIZE)]   # (1, 16)
    b_lin = b_lin_ref[0]                                                 # scalar

    # (1) Input projection + fused (b_ih + b_hh) bias for ALL timesteps in one
    #     VPU broadcast multiply (contraction dim is INPUT_SIZE == 1, so this
    #     is an outer product — no MXU involvement, stays in registers).
    xw_all = w_ih_col * x_ref[...] + bias_col        # (16, seq_lanes)

    # Zero only the padded tail columns of the hidden-history scratch so the
    # output projection reads defined data; those columns are sliced off in
    # the wrapper and cannot contaminate kept columns.
    if seq_len < seq_lanes:
        h_all_ref[:, pl.ds(seq_len, seq_lanes - seq_len)] = jnp.zeros(
            (HIDDEN_SIZE, seq_lanes - seq_len), jnp.float32)

    # (2) Serial recurrence, fully unrolled (seq_len is a static Python int).
    #     Hidden state stays in vregs as a (16, 1) column; per-step work is
    #     one 16x16 @ 16x1 MXU matmul + tanh (EUP) + one static-offset store.
    h = h0_col
    for t in range(seq_len):
        pre = xw_all[:, t:t + 1] + jnp.dot(
            w_hh, h, preferred_element_type=jnp.float32)
        h = jnp.tanh(pre)
        h_all_ref[:, pl.ds(t, 1)] = h
    h_out_ref[...] = h                                # (16, 1)

    # (3) Output projection hoisted out of the loop and lane-dense: one
    #     (1,16) @ (16, seq_lanes) matmul + one unmasked full-width store.
    out_ref[...] = (
        jnp.dot(w_lin_row, h_all_ref[...], preferred_element_type=jnp.float32)
        + b_lin)


def net_forward(x, hidden_prev, params):
    """Mirrors Net.forward(x, hidden_prev).

    x           : (1, seq, input_size)   (batch_first, batch must be 1)
    hidden_prev : (1, 1, hidden_size)
    returns (out, hidden_prev_new) with shapes (1, seq, 1), (1, 1, hidden)
    """
    assert x.shape[0] == 1 and x.shape[2] == INPUT_SIZE
    seq = x.shape[1]
    # Time lives on the LANE axis inside the kernel; pad to a multiple of 128
    # so x / hidden-history / out are lane-dense (unmasked vector stores).
    seq_lanes = ((seq + 127) // 128) * 128

    x_row = x.reshape(1, seq).astype(jnp.float32)
    if seq_lanes != seq:
        x_row = jnp.pad(x_row, ((0, 0), (0, seq_lanes - seq)))

    # Pack all small parameters into ONE f32 slab (single DMA) + scalar bias
    # in SMEM: 3 pallas_call operands instead of 7.
    slab = jnp.zeros((HIDDEN_SIZE, _SLAB_COLS), jnp.float32)
    slab = slab.at[:, _WHH_COL:_WHH_COL + HIDDEN_SIZE].set(
        params["w_hh"].astype(jnp.float32))
    slab = slab.at[:, _WIH_COL].set(
        params["w_ih"].reshape(HIDDEN_SIZE).astype(jnp.float32))
    slab = slab.at[:, _BIAS_COL].set(
        (params["b_ih"] + params["b_hh"]).astype(jnp.float32))
    slab = slab.at[:, _H0_COL].set(
        hidden_prev.reshape(HIDDEN_SIZE).astype(jnp.float32))
    slab = slab.at[0, _WLIN_COL:_WLIN_COL + HIDDEN_SIZE].set(
        params["w_lin"].reshape(HIDDEN_SIZE).astype(jnp.float32))
    b_lin = params["b_lin"].reshape(1).astype(jnp.float32)

    vmem = pl.BlockSpec(memory_space=pltpu.MemorySpace.VMEM)
    smem = pl.BlockSpec(memory_space=pltpu.MemorySpace.SMEM)

    out_row, h_last_col = pl.pallas_call(
        functools.partial(rnn_linear_kernel, seq_len=seq),
        out_shape=(
            jax.ShapeDtypeStruct((1, seq_lanes), jnp.float32),
            jax.ShapeDtypeStruct((HIDDEN_SIZE, 1), jnp.float32),
        ),
        in_specs=[vmem, vmem, smem],
        out_specs=(vmem, vmem),
        scratch_shapes=[pltpu.VMEM((HIDDEN_SIZE, seq_lanes), jnp.float32)],
    )(x_row, slab, b_lin)

    # view(-1, hidden) -> linear -> unsqueeze(0), with pad columns dropped.
    out = out_row[0, :seq].reshape(1, seq, OUTPUT_SIZE)
    hidden_new = h_last_col.reshape(1, 1, HIDDEN_SIZE)
    return out, hidden_new


def init_params(key):
    """Deterministic parameter init mirroring __init__:
    RNN params ~ N(0, 0.001); Linear with PyTorch-style uniform bounds."""
    k1, k2, k3, k4, k5, k6 = jax.random.split(key, 6)
    std = 0.001
    bound = 1.0 / jnp.sqrt(HIDDEN_SIZE)
    return {
        "w_ih": jax.random.normal(k1, (HIDDEN_SIZE, INPUT_SIZE), jnp.float32) * std,
        "w_hh": jax.random.normal(k2, (HIDDEN_SIZE, HIDDEN_SIZE), jnp.float32) * std,
        "b_ih": jax.random.normal(k3, (HIDDEN_SIZE,), jnp.float32) * std,
        "b_hh": jax.random.normal(k4, (HIDDEN_SIZE,), jnp.float32) * std,
        "w_lin": jax.random.uniform(k5, (OUTPUT_SIZE, HIDDEN_SIZE), jnp.float32,
                                    minval=-bound, maxval=bound),
        "b_lin": jax.random.uniform(k6, (OUTPUT_SIZE,), jnp.float32,
                                    minval=-bound, maxval=bound),
    }


if __name__ == "__main__":
    key = jax.random.PRNGKey(0)
    pkey, xkey = jax.random.split(key)
    params = init_params(pkey)

    seq = 8
    x = jax.random.normal(xkey, (1, seq, INPUT_SIZE), jnp.float32)
    hidden_prev = jnp.zeros((1, 1, HIDDEN_SIZE), jnp.float32)

    out, hidden_new = net_forward(x, hidden_prev, params)
    jax.block_until_ready((out, hidden_new))

    assert out.shape == (1, seq, OUTPUT_SIZE)
    assert hidden_new.shape == (1, 1, HIDDEN_SIZE)

    # reference check in plain JAX (Elman RNN + linear)
    h = hidden_prev.reshape(1, HIDDEN_SIZE)
    ref_out = []
    for t in range(seq):
        xt = x[0, t:t + 1, :]                                   # (1, 1)
        h = jnp.tanh(xt @ params["w_ih"].T + h @ params["w_hh"].T
                     + params["b_ih"] + params["b_hh"])
        ref_out.append(h @ params["w_lin"].T + params["b_lin"])
    ref_out = jnp.stack(ref_out, axis=1)                        # (1, seq, 1)
    assert jnp.allclose(out, ref_out, atol=1e-5), "mismatch vs reference"
    assert jnp.allclose(hidden_new.reshape(1, HIDDEN_SIZE), h, atol=1e-5)

    print("KERNEL_OK")
</pallas_src>

<mosaic_0001>
module attributes {stable_mosaic.version = 11 : i64} {
  func.func @rnn_linear_kernel(%arg0: memref<1x128xf32, #tpu.memory_space<vmem>>, %arg1: memref<16x35xf32, #tpu.memory_space<vmem>>, %arg2: memref<1xf32, #tpu.memory_space<smem>>, %arg3: memref<1x128xf32, #tpu.memory_space<vmem>>, %arg4: memref<16x1xf32, #tpu.memory_space<vmem>>, %arg5: memref<16x128xf32, #tpu.memory_space<vmem>>) attributes {dimension_semantics = [], scalar_prefetch = 0 : i64, scratch_operands = 1 : i64, tpu.core_type = #tpu.core_type<tc>} {
    %c0 = arith.constant 0 : index
    %c0_0 = arith.constant 0 : index
    %0 = vector.load %arg1[%c0, %c0_0] : memref<16x35xf32, #tpu.memory_space<vmem>>, vector<16x16xf32>
    %c0_1 = arith.constant 0 : index
    %c16 = arith.constant 16 : index
    %1 = vector.load %arg1[%c0_1, %c16] : memref<16x35xf32, #tpu.memory_space<vmem>>, vector<16x1xf32>
    %c0_2 = arith.constant 0 : index
    %c17 = arith.constant 17 : index
    %2 = vector.load %arg1[%c0_2, %c17] : memref<16x35xf32, #tpu.memory_space<vmem>>, vector<16x1xf32>
    %c0_3 = arith.constant 0 : index
    %c18 = arith.constant 18 : index
    %3 = vector.load %arg1[%c0_3, %c18] : memref<16x35xf32, #tpu.memory_space<vmem>>, vector<16x1xf32>
    %c0_4 = arith.constant 0 : index
    %c19 = arith.constant 19 : index
    %4 = vector.load %arg1[%c0_4, %c19] : memref<16x35xf32, #tpu.memory_space<vmem>>, vector<1x16xf32>
    %c0_5 = arith.constant 0 : index
    %5 = memref.load %arg2[%c0_5] : memref<1xf32, #tpu.memory_space<smem>>
    %c0_6 = arith.constant 0 : index
    %c0_7 = arith.constant 0 : index
    %6 = vector.load %arg0[%c0_6, %c0_7] : memref<1x128xf32, #tpu.memory_space<vmem>>, vector<1x128xf32>
    %7 = vector.broadcast %1 : vector<16x1xf32> to vector<16x128xf32>
    %8 = vector.broadcast %6 : vector<1x128xf32> to vector<16x128xf32>
    %9 = arith.mulf %7, %8 : vector<16x128xf32>
    %10 = vector.broadcast %2 : vector<16x1xf32> to vector<16x128xf32>
    %11 = arith.addf %9, %10 : vector<16x128xf32>
    %cst = arith.constant 0.000000e+00 : f32
    %12 = vector.broadcast %cst : f32 to vector<16x120xf32>
    %c0_8 = arith.constant 0 : index
    %c8 = arith.constant 8 : index
    %13 = vector.load %arg5[%c0_8, %c8] : memref<16x128xf32, #tpu.memory_space<vmem>>, vector<16x120xf32>
    tpu.vector_store %arg5[%c0_8, %c8], %12 {strides = array<i32>} : memref<16x128xf32, #tpu.memory_space<vmem>>, vector<16x120xf32>,
    %14 = vector.extract_strided_slice %11 {offsets = [0, 0], sizes = [16, 1], strides = [1, 1]} : vector<16x128xf32> to vector<16x1xf32>
    %cst_9 = arith.constant dense<0.000000e+00> : vector<16x1xf32>
    %15 = tpu.matmul %0, %3, %cst_9 {dimension_numbers = #tpu.dot_dimension_numbers<[1], [0], [0], [1], [0, 0, 1, 1], [], []>} : vector<16x16xf32>, vector<16x1xf32>, vector<16x1xf32> -> vector<16x1xf32>
    %16 = arith.addf %14, %15 : vector<16x1xf32>
    %17 = math.tanh %16 : vector<16x1xf32>
    %c0_10 = arith.constant 0 : index
    %c0_11 = arith.constant 0 : index
    %18 = vector.load %arg5[%c0_10, %c0_11] : memref<16x128xf32, #tpu.memory_space<vmem>>, vector<16x1xf32>
    tpu.vector_store %arg5[%c0_10, %c0_11], %17 {strides = array<i32>} : memref<16x128xf32, #tpu.memory_space<vmem>>, vector<16x1xf32>,
    %19 = vector.extract_strided_slice %11 {offsets = [0, 1], sizes = [16, 1], strides = [1, 1]} : vector<16x128xf32> to vector<16x1xf32>
    %cst_12 = arith.constant dense<0.000000e+00> : vector<16x1xf32>
    %20 = tpu.matmul %0, %17, %cst_12 {dimension_numbers = #tpu.dot_dimension_numbers<[1], [0], [0], [1], [0, 0, 1, 1], [], []>} : vector<16x16xf32>, vector<16x1xf32>, vector<16x1xf32> -> vector<16x1xf32>
    %21 = arith.addf %19, %20 : vector<16x1xf32>
    %22 = math.tanh %21 : vector<16x1xf32>
    %c0_13 = arith.constant 0 : index
    %c1 = arith.constant 1 : index
    %23 = vector.load %arg5[%c0_13, %c1] : memref<16x128xf32, #tpu.memory_space<vmem>>, vector<16x1xf32>
    tpu.vector_store %arg5[%c0_13, %c1], %22 {strides = array<i32>} : memref<16x128xf32, #tpu.memory_space<vmem>>, vector<16x1xf32>,
    %24 = vector.extract_strided_slice %11 {offsets = [0, 2], sizes = [16, 1], strides = [1, 1]} : vector<16x128xf32> to vector<16x1xf32>
    %cst_14 = arith.constant dense<0.000000e+00> : vector<16x1xf32>
    %25 = tpu.matmul %0, %22, %cst_14 {dimension_numbers = #tpu.dot_dimension_numbers<[1], [0], [0], [1], [0, 0, 1, 1], [], []>} : vector<16x16xf32>, vector<16x1xf32>, vector<16x1xf32> -> vector<16x1xf32>
    %26 = arith.addf %24, %25 : vector<16x1xf32>
    %27 = math.tanh %26 : vector<16x1xf32>
    %c0_15 = arith.constant 0 : index
    %c2 = arith.constant 2 : index
    %28 = vector.load %arg5[%c0_15, %c2] : memref<16x128xf32, #tpu.memory_space<vmem>>, vector<16x1xf32>
    tpu.vector_store %arg5[%c0_15, %c2], %27 {strides = array<i32>} : memref<16x128xf32, #tpu.memory_space<vmem>>, vector<16x1xf32>,
    %29 = vector.extract_strided_slice %11 {offsets = [0, 3], sizes = [16, 1], strides = [1, 1]} : vector<16x128xf32> to vector<16x1xf32>
    %cst_16 = arith.constant dense<0.000000e+00> : vector<16x1xf32>
    %30 = tpu.matmul %0, %27, %cst_16 {dimension_numbers = #tpu.dot_dimension_numbers<[1], [0], [0], [1], [0, 0, 1, 1], [], []>} : vector<16x16xf32>, vector<16x1xf32>, vector<16x1xf32> -> vector<16x1xf32>
    %31 = arith.addf %29, %30 : vector<16x1xf32>
    %32 = math.tanh %31 : vector<16x1xf32>
    %c0_17 = arith.constant 0 : index
    %c3 = arith.constant 3 : index
    %33 = vector.load %arg5[%c0_17, %c3] : memref<16x128xf32, #tpu.memory_space<vmem>>, vector<16x1xf32>
    tpu.vector_store %arg5[%c0_17, %c3], %32 {strides = array<i32>} : memref<16x128xf32, #tpu.memory_space<vmem>>, vector<16x1xf32>,
    %34 = vector.extract_strided_slice %11 {offsets = [0, 4], sizes = [16, 1], strides = [1, 1]} : vector<16x128xf32> to vector<16x1xf32>
    %cst_18 = arith.constant dense<0.000000e+00> : vector<16x1xf32>
    %35 = tpu.matmul %0, %32, %cst_18 {dimension_numbers = #tpu.dot_dimension_numbers<[1], [0], [0], [1], [0, 0, 1, 1], [], []>} : vector<16x16xf32>, vector<16x1xf32>, vector<16x1xf32> -> vector<16x1xf32>
    %36 = arith.addf %34, %35 : vector<16x1xf32>
    %37 = math.tanh %36 : vector<16x1xf32>
    %c0_19 = arith.constant 0 : index
    %c4 = arith.constant 4 : index
    %38 = vector.load %arg5[%c0_19, %c4] : memref<16x128xf32, #tpu.memory_space<vmem>>, vector<16x1xf32>
    tpu.vector_store %arg5[%c0_19, %c4], %37 {strides = array<i32>} : memref<16x128xf32, #tpu.memory_space<vmem>>, vector<16x1xf32>,
    %39 = vector.extract_strided_slice %11 {offsets = [0, 5], sizes = [16, 1], strides = [1, 1]} : vector<16x128xf32> to vector<16x1xf32>
    %cst_20 = arith.constant dense<0.000000e+00> : vector<16x1xf32>
    %40 = tpu.matmul %0, %37, %cst_20 {dimension_numbers = #tpu.dot_dimension_numbers<[1], [0], [0], [1], [0, 0, 1, 1], [], []>} : vector<16x16xf32>, vector<16x1xf32>, vector<16x1xf32> -> vector<16x1xf32>
    %41 = arith.addf %39, %40 : vector<16x1xf32>
    %42 = math.tanh %41 : vector<16x1xf32>
    %c0_21 = arith.constant 0 : index
    %c5 = arith.constant 5 : index
    %43 = vector.load %arg5[%c0_21, %c5] : memref<16x128xf32, #tpu.memory_space<vmem>>, vector<16x1xf32>
    tpu.vector_store %arg5[%c0_21, %c5], %42 {strides = array<i32>} : memref<16x128xf32, #tpu.memory_space<vmem>>, vector<16x1xf32>,
    %44 = vector.extract_strided_slice %11 {offsets = [0, 6], sizes = [16, 1], strides = [1, 1]} : vector<16x128xf32> to vector<16x1xf32>
    %cst_22 = arith.constant dense<0.000000e+00> : vector<16x1xf32>
    %45 = tpu.matmul %0, %42, %cst_22 {dimension_numbers = #tpu.dot_dimension_numbers<[1], [0], [0], [1], [0, 0, 1, 1], [], []>} : vector<16x16xf32>, vector<16x1xf32>, vector<16x1xf32> -> vector<16x1xf32>
    %46 = arith.addf %44, %45 : vector<16x1xf32>
    %47 = math.tanh %46 : vector<16x1xf32>
    %c0_23 = arith.constant 0 : index
    %c6 = arith.constant 6 : index
    %48 = vector.load %arg5[%c0_23, %c6] : memref<16x128xf32, #tpu.memory_space<vmem>>, vector<16x1xf32>
    tpu.vector_store %arg5[%c0_23, %c6], %47 {strides = array<i32>} : memref<16x128xf32, #tpu.memory_space<vmem>>, vector<16x1xf32>,
    %49 = vector.extract_strided_slice %11 {offsets = [0, 7], sizes = [16, 1], strides = [1, 1]} : vector<16x128xf32> to vector<16x1xf32>
    %cst_24 = arith.constant dense<0.000000e+00> : vector<16x1xf32>
    %50 = tpu.matmul %0, %47, %cst_24 {dimension_numbers = #tpu.dot_dimension_numbers<[1], [0], [0], [1], [0, 0, 1, 1], [], []>} : vector<16x16xf32>, vector<16x1xf32>, vector<16x1xf32> -> vector<16x1xf32>
    %51 = arith.addf %49, %50 : vector<16x1xf32>
    %52 = math.tanh %51 : vector<16x1xf32>
    %c0_25 = arith.constant 0 : index
    %c7 = arith.constant 7 : index
    %53 = vector.load %arg5[%c0_25, %c7] : memref<16x128xf32, #tpu.memory_space<vmem>>, vector<16x1xf32>
    tpu.vector_store %arg5[%c0_25, %c7], %52 {strides = array<i32>} : memref<16x128xf32, #tpu.memory_space<vmem>>, vector<16x1xf32>,
    %c0_26 = arith.constant 0 : index
    %c0_27 = arith.constant 0 : index
    %54 = vector.load %arg4[%c0_26, %c0_27] : memref<16x1xf32, #tpu.memory_space<vmem>>, vector<16x1xf32>
    tpu.vector_store %arg4[%c0_26, %c0_27], %52 {strides = array<i32>} : memref<16x1xf32, #tpu.memory_space<vmem>>, vector<16x1xf32>,
    %c0_28 = arith.constant 0 : index
    %c0_29 = arith.constant 0 : index
    %55 = vector.load %arg5[%c0_28, %c0_29] : memref<16x128xf32, #tpu.memory_space<vmem>>, vector<16x128xf32>
    %cst_30 = arith.constant dense<0.000000e+00> : vector<1x128xf32>
    %56 = tpu.matmul %4, %55, %cst_30 {dimension_numbers = #tpu.dot_dimension_numbers<[1], [0], [0], [1], [0, 0, 1, 1], [], []>} : vector<1x16xf32>, vector<16x128xf32>, vector<1x128xf32> -> vector<1x128xf32>
    %57 = vector.broadcast %5 : f32 to vector<1x128xf32>
    %58 = arith.addf %56, %57 : vector<1x128xf32>
    %c0_31 = arith.constant 0 : index
    %c0_32 = arith.constant 0 : index
    %59 = vector.load %arg3[%c0_31, %c0_32] : memref<1x128xf32, #tpu.memory_space<vmem>>, vector<1x128xf32>
    tpu.vector_store %arg3[%c0_31, %c0_32], %58 {strides = array<i32>} : memref<1x128xf32, #tpu.memory_space<vmem>>, vector<1x128xf32>,
    return
  }
}

</mosaic_0001>

<llo_original>
// kernel: tpu_custom_call.1
$region0: #{tpu_custom_call.1}
  #allocation0 [shape = 'u32[]', space=smem, size = 0x4, offset = 0x4, fixed_abs, tag = 'smem constant byte address 0x4 - core index']
  #allocation1 [shape = 'u32[72,128]{1,0:T(1,128)}', space=vmem, size = 0x9000, scoped, tag = 'internal scratch']
  #allocation2 [shape = 'f32[16,128]{1,0:T(8,128)}', space=vmem, size = 0x2000, scoped, tag = 'scratch operand']
  #allocation3 [shape = 'f32[1]{0:T(128)S(6)}', space=smem, size = 0x200, scoped, tag = 'scoped memory for tpu_custom_call.1']
  %s0 = inlined_call_operand.vmem [shape: f32[1,128], index: 0, kind: input, shape index: {}]
  %s1 = inlined_call_operand.hbm [shape: f32[16,35], index: 1, kind: input, shape index: {}]
  %s2 = inlined_call_operand.<no memory space> [shape: f32[1], index: 2, kind: input, shape index: {}]
  %s3 = inlined_call_operand.hbm [shape: f32[1,128], index: 3, kind: output, shape index: {0}]
  %s4 = inlined_call_operand.vmem [shape: f32[16,1], index: 4, kind: output, shape index: {1}]
  %5 = xla_tuple %s3, %s4
  %s6 = sld [smem:[#allocation0]]
  $region34: #{tpu_custom_call.1} parent=0
    _
  %s8 = ssub.s32 1, %s6
  %s9 = scalar_select 0, %s8, %s6
  %10 = sst [smem:[#allocation3]] %s2
  $region1: #{tpu_custom_call.1} parent=0
    #allocation4 [shape = 'u8[8192]{0}', space=vmem, size = 0x2000, scoped, tag = 'input window, operand 1, single buffered']
    #allocation5 [shape = 's32[1]{0}', space=sflag, size = 0x4, scoped, tag = 'scoped memory for tpu_custom_call.1']
    #allocation6 [shape = 's32[1]{0}', space=sflag, size = 0x4, scoped, tag = 'scoped memory for tpu_custom_call.1']
    #allocation7 [shape = 'u8[512]{0}', space=vmem, size = 0x400, scoped, tag = 'output window, operand 0, single buffered']
    %11 = vsyncpa [#allocation5], 0
    %12 = vsyncpa [#allocation6], 0
    // Predicated region
    $region2: #{tpu_custom_call.1} parent=1 // pred_check
      _
    $region3: #{tpu_custom_call.1} parent=1 // pred_check_branch
      %14 = sbr.rel (0) target = $region5
    $region4: #{tpu_custom_call.1} parent=1 // pred_region
      _
    $region5: #{tpu_custom_call.1} parent=1 // pred_fallthru
      _
    // Predicated region
    $region6: #{tpu_custom_call.1} parent=1 // pred_check
      _
    $region7: #{tpu_custom_call.1} parent=1 // pred_check_branch
      %16 = sbr.rel (0) target = $region9
    $region8: #{tpu_custom_call.1} parent=1 // pred_region
      %18 = vsyncadd [#allocation5], 0
      %s19 = sshll.u32 %s1, 4
      %s20 = int_to_ptr.hbm [resolvable:$true] %s19
      %s21 = sshll.u32 [#allocation4], 4
      %s22 = int_to_ptr.vmem [resolvable:$true] %s21
      %27 = dma.hbm_to_vmem [thread:$0]  %s20, 256, %s22, [#allocation5], 128, 128, 8
    $region9: #{tpu_custom_call.1} parent=1 // pred_fallthru
      _
    // Predicated region
    $region10: #{tpu_custom_call.1} parent=1 // pred_check
      _
    $region11: #{tpu_custom_call.1} parent=1 // pred_check_branch
      %29 = sbr.rel (0) target = $region13
    $region12: #{tpu_custom_call.1} parent=1 // pred_region
      _
    $region13: #{tpu_custom_call.1} parent=1 // pred_fallthru
      _
    // Predicated region
    $region14: #{tpu_custom_call.1} parent=1 // pred_check
      _
    $region15: #{tpu_custom_call.1} parent=1 // pred_check_branch
      %31 = sbr.rel (0) target = $region17
    $region16: #{tpu_custom_call.1} parent=1 // pred_region
      %33 = dma.done [#allocation5], 256
    $region17: #{tpu_custom_call.1} parent=1 // pred_fallthru
      _
    %v34 = vld [vmem:[#allocation4] sm:$0xff]
    %v35 = vld [vmem:[#allocation4 + $0x8] sm:$0xff]
    %v36 = vld [vmem:[#allocation4] sm:$0x1]
    %s37 = sld [smem:[#allocation3]]
    %v38 = vld [vmem:[%s0] sm:$0x1]
    %40 = vset.pattern.permute.xlu0 16
    %41 = vperm.xlu0 %40, %v34
    %v42 = vpop.permute.xlu0 %41
    %45 = vset.pattern.permute.xlu0 16
    %46 = vperm.xlu0 %45, %v35
    %v47 = vpop.permute.xlu0 %46
    %v50 = vperm.slane %v38, 0
    %v52 = vmul.f32 %v42, %v50
    %v53 = vmul.f32 %v47, %v50
    %54 = vset.pattern.permute.xlu0 17
    %55 = vperm.xlu0 %54, %v34
    %v56 = vpop.permute.xlu0 %55
    %58 = vset.pattern.permute.xlu0 17
    %59 = vperm.xlu0 %58, %v35
    %v60 = vpop.permute.xlu0 %59
    %v62 = vadd.f32 %v52, %v56
    %v63 = vadd.f32 %v53, %v60
    %vm64 = vcmask 1047616
    %65 = vst.msk [vmem:[#allocation2] sm:$0xff] %vm64, 0.0
    %66 = vst.msk [vmem:[#allocation2 + $0x8] sm:$0xff] %vm64, 0.0
    %67 = vrot.lane.b32.xlu0 %v34, 110
    %v68 = vpop.permute.xlu0 %67
    %69 = vrot.lane.b32.xlu0 %v35, 110
    %v70 = vpop.permute.xlu0 %69
    %vm73 = vcmask 130048
    %v74 = vsel %vm73, %v34, 0
    %v76 = vsel %vm73, %v35, 0
    %78 = vmatpush.msra.mxu0 0.0
    %79 = vmatpush.msra.mxu0 0.0
    %80 = vmatpush.msra.mxu0 0.0
    %81 = vmatpush.msra.mxu0 0.0
    %82 = vmatpush.msra.mxu0 0.0
    %83 = vmatpush.msra.mxu0 0.0
    %84 = vmatpush.msra.mxu0 0.0
    %85 = vmatpush.msra.mxu0 0.0
    %86 = vmatpush.msra.mxu0 0.0
    %87 = vmatpush.msra.mxu0 0.0
    %88 = vmatpush.msra.mxu0 0.0
    %89 = vmatpush.msra.mxu0 0.0
    %90 = vmatpush.msra.mxu0 0.0
    %91 = vmatpush.msra.mxu0 0.0
    %92 = vmatpush.msra.mxu0 %v70
    %93 = vmatpush.msra.mxu0 %v68
    %94 = vmatmul.f32.gmra.mxu0 %v74
    %v95 = vpop.f32.mrf.mxu0
    %v96 = vadd.f32 0.0, %v95
    %97 = vmatmul.f32.gmra.mxu0 %v76
    %v98 = vpop.f32.mrf.mxu0
    %v99 = vadd.f32 0.0, %v98
    %100 = vdwg.mxu0
    %v101 = vadd.f32 %v62, %v96
    %v102 = vadd.f32 %v63, %v99
    %v103 = vtanh.pop %v101
    %v104 = vtanh.pop %v102
    %vm105 = vcmask 7168
    %106 = vst.msk [vmem:[#allocation2] sm:$0xff] %vm105, %v103
    %107 = vst.msk [vmem:[#allocation2 + $0x8] sm:$0xff] %vm105, %v104
    %108 = vmatpush.msra.mxu0 0.0
    %109 = vmatpush.msra.mxu0 0.0
    %110 = vmatpush.msra.mxu0 0.0
    %111 = vmatpush.msra.mxu0 0.0
    %112 = vmatpush.msra.mxu0 0.0
    %113 = vmatpush.msra.mxu0 0.0
    %114 = vmatpush.msra.mxu0 0.0
    %115 = vmatpush.msra.mxu0 0.0
    %116 = vmatpush.msra.mxu0 0.0
    %117 = vmatpush.msra.mxu0 0.0
    %118 = vmatpush.msra.mxu0 0.0
    %119 = vmatpush.msra.mxu0 0.0
    %120 = vmatpush.msra.mxu0 0.0
    %121 = vmatpush.msra.mxu0 0.0
    %122 = vmatpush.msra.mxu0 %v104
    %123 = vmatpush.msra.mxu0 %v103
    %124 = vmatmul.f32.gmra.mxu0 %v74
    %v125 = vpop.f32.mrf.mxu0
    %v126 = vadd.f32 0.0, %v125
    %127 = vmatmul.f32.gmra.mxu0 %v76
    %v128 = vpop.f32.mrf.mxu0
    %v129 = vadd.f32 0.0, %v128
    %130 = vdwg.mxu0
    %133 = vrot.lane.b32.xlu0 %v126, 1
    %v134 = vpop.permute.xlu0 %133
    %135 = vrot.lane.b32.xlu0 %v129, 1
    %v136 = vpop.permute.xlu0 %135
    %v139 = vadd.f32 %v62, %v134
    %v140 = vadd.f32 %v63, %v136
    %v141 = vtanh.pop %v139
    %v142 = vtanh.pop %v140
    %vm143 = vcmask 15368
    %144 = vst.msk [vmem:[#allocation2] sm:$0xff] %vm143, %v141
    %145 = vst.msk [vmem:[#allocation2 + $0x8] sm:$0xff] %vm143, %v142
    %148 = vrot.lane.b32.xlu0 %v141, 127
    %v149 = vpop.permute.xlu0 %148
    %150 = vrot.lane.b32.xlu0 %v142, 127
    %v151 = vpop.permute.xlu0 %150
    %154 = vmatpush.msra.mxu0 0.0
    %155 = vmatpush.msra.mxu0 0.0
    %156 = vmatpush.msra.mxu0 0.0
    %157 = vmatpush.msra.mxu0 0.0
    %158 = vmatpush.msra.mxu0 0.0
    %159 = vmatpush.msra.mxu0 0.0
    %160 = vmatpush.msra.mxu0 0.0
    %161 = vmatpush.msra.mxu0 0.0
    %162 = vmatpush.msra.mxu0 0.0
    %163 = vmatpush.msra.mxu0 0.0
    %164 = vmatpush.msra.mxu0 0.0
    %165 = vmatpush.msra.mxu0 0.0
    %166 = vmatpush.msra.mxu0 0.0
    %167 = vmatpush.msra.mxu0 0.0
    %168 = vmatpush.msra.mxu0 %v151
    %169 = vmatpush.msra.mxu0 %v149
    %170 = vmatmul.f32.gmra.mxu0 %v74
    %v171 = vpop.f32.mrf.mxu0
    %v172 = vadd.f32 0.0, %v171
    %173 = vmatmul.f32.gmra.mxu0 %v76
    %v174 = vpop.f32.mrf.mxu0
    %v175 = vadd.f32 0.0, %v174
    %176 = vdwg.mxu0
    %179 = vrot.lane.b32.xlu0 %v172, 2
    %v180 = vpop.permute.xlu0 %179
    %181 = vrot.lane.b32.xlu0 %v175, 2
    %v182 = vpop.permute.xlu0 %181
    %v185 = vadd.f32 %v62, %v180
    %v186 = vadd.f32 %v63, %v182
    %v187 = vtanh.pop %v185
    %v188 = vtanh.pop %v186
    %vm189 = vcmask 23568
    %190 = vst.msk [vmem:[#allocation2] sm:$0xff] %vm189, %v187
    %191 = vst.msk [vmem:[#allocation2 + $0x8] sm:$0xff] %vm189, %v188
    %194 = vrot.lane.b32.xlu0 %v187, 126
    %v195 = vpop.permute.xlu0 %194
    %196 = vrot.lane.b32.xlu0 %v188, 126
    %v197 = vpop.permute.xlu0 %196
    %200 = vmatpush.msra.mxu0 0.0
    %201 = vmatpush.msra.mxu0 0.0
    %202 = vmatpush.msra.mxu0 0.0
    %203 = vmatpush.msra.mxu0 0.0
    %204 = vmatpush.msra.mxu0 0.0
    %205 = vmatpush.msra.mxu0 0.0
    %206 = vmatpush.msra.mxu0 0.0
    %207 = vmatpush.msra.mxu0 0.0
    %208 = vmatpush.msra.mxu0 0.0
    %209 = vmatpush.msra.mxu0 0.0
    %210 = vmatpush.msra.mxu0 0.0
    %211 = vmatpush.msra.mxu0 0.0
    %212 = vmatpush.msra.mxu0 0.0
    %213 = vmatpush.msra.mxu0 0.0
    %214 = vmatpush.msra.mxu0 %v197
    %215 = vmatpush.msra.mxu0 %v195
    %216 = vmatmul.f32.gmra.mxu0 %v74
    %v217 = vpop.f32.mrf.mxu0
    %v218 = vadd.f32 0.0, %v217
    %219 = vmatmul.f32.gmra.mxu0 %v76
    %v220 = vpop.f32.mrf.mxu0
    %v221 = vadd.f32 0.0, %v220
    %222 = vdwg.mxu0
    %225 = vrot.lane.b32.xlu0 %v218, 3
    %v226 = vpop.permute.xlu0 %225
    %227 = vrot.lane.b32.xlu0 %v221, 3
    %v228 = vpop.permute.xlu0 %227
    %v231 = vadd.f32 %v62, %v226
    %v232 = vadd.f32 %v63, %v228
    %v233 = vtanh.pop %v231
    %v234 = vtanh.pop %v232
    %vm235 = vcmask 31768
    %236 = vst.msk [vmem:[#allocation2] sm:$0xff] %vm235, %v233
    %237 = vst.msk [vmem:[#allocation2 + $0x8] sm:$0xff] %vm235, %v234
    %240 = vrot.lane.b32.xlu0 %v233, 125
    %v241 = vpop.permute.xlu0 %240
    %242 = vrot.lane.b32.xlu0 %v234, 125
    %v243 = vpop.permute.xlu0 %242
    %246 = vmatpush.msra.mxu0 0.0
    %247 = vmatpush.msra.mxu0 0.0
    %248 = vmatpush.msra.mxu0 0.0
    %249 = vmatpush.msra.mxu0 0.0
    %250 = vmatpush.msra.mxu0 0.0
    %251 = vmatpush.msra.mxu0 0.0
    %252 = vmatpush.msra.mxu0 0.0
    %253 = vmatpush.msra.mxu0 0.0
    %254 = vmatpush.msra.mxu0 0.0
    %255 = vmatpush.msra.mxu0 0.0
    %256 = vmatpush.msra.mxu0 0.0
    %257 = vmatpush.msra.mxu0 0.0
    %258 = vmatpush.msra.mxu0 0.0
    %259 = vmatpush.msra.mxu0 0.0
    %260 = vmatpush.msra.mxu0 %v243
    %261 = vmatpush.msra.mxu0 %v241
    %262 = vmatmul.f32.gmra.mxu0 %v74
    %v263 = vpop.f32.mrf.mxu0
    %v264 = vadd.f32 0.0, %v263
    %265 = vmatmul.f32.gmra.mxu0 %v76
    %v266 = vpop.f32.mrf.mxu0
    %v267 = vadd.f32 0.0, %v266
    %268 = vdwg.mxu0
    %271 = vrot.lane.b32.xlu0 %v264, 4
    %v272 = vpop.permute.xlu0 %271
    %273 = vrot.lane.b32.xlu0 %v267, 4
    %v274 = vpop.permute.xlu0 %273
    %v277 = vadd.f32 %v62, %v272
    %v278 = vadd.f32 %v63, %v274
    %v279 = vtanh.pop %v277
    %v280 = vtanh.pop %v278
    %vm281 = vcmask 39968
    %282 = vst.msk [vmem:[#allocation2] sm:$0xff] %vm281, %v279
    %283 = vst.msk [vmem:[#allocation2 + $0x8] sm:$0xff] %vm281, %v280
    %286 = vrot.lane.b32.xlu0 %v279, 124
    %v287 = vpop.permute.xlu0 %286
    %288 = vrot.lane.b32.xlu0 %v280, 124
    %v289 = vpop.permute.xlu0 %288
    %292 = vmatpush.msra.mxu0 0.0
    %293 = vmatpush.msra.mxu0 0.0
    %294 = vmatpush.msra.mxu0 0.0
    %295 = vmatpush.msra.mxu0 0.0
    %296 = vmatpush.msra.mxu0 0.0
    %297 = vmatpush.msra.mxu0 0.0
    %298 = vmatpush.msra.mxu0 0.0
    %299 = vmatpush.msra.mxu0 0.0
    %300 = vmatpush.msra.mxu0 0.0
    %301 = vmatpush.msra.mxu0 0.0
    %302 = vmatpush.msra.mxu0 0.0
    %303 = vmatpush.msra.mxu0 0.0
    %304 = vmatpush.msra.mxu0 0.0
    %305 = vmatpush.msra.mxu0 0.0
    %306 = vmatpush.msra.mxu0 %v289
    %307 = vmatpush.msra.mxu0 %v287
    %308 = vmatmul.f32.gmra.mxu0 %v74
    %v309 = vpop.f32.mrf.mxu0
    %v310 = vadd.f32 0.0, %v309
    %311 = vmatmul.f32.gmra.mxu0 %v76
    %v312 = vpop.f32.mrf.mxu0
    %v313 = vadd.f32 0.0, %v312
    %314 = vdwg.mxu0
    %317 = vrot.lane.b32.xlu0 %v310, 5
    %v318 = vpop.permute.xlu0 %317
    %319 = vrot.lane.b32.xlu0 %v313, 5
    %v320 = vpop.permute.xlu0 %319
    %v323 = vadd.f32 %v62, %v318
    %v324 = vadd.f32 %v63, %v320
    %v325 = vtanh.pop %v323
    %v326 = vtanh.pop %v324
    %vm327 = vcmask 48168
    %328 = vst.msk [vmem:[#allocation2] sm:$0xff] %vm327, %v325
    %329 = vst.msk [vmem:[#allocation2 + $0x8] sm:$0xff] %vm327, %v326
    %332 = vrot.lane.b32.xlu0 %v325, 123
    %v333 = vpop.permute.xlu0 %332
    %334 = vrot.lane.b32.xlu0 %v326, 123
    %v335 = vpop.permute.xlu0 %334
    %338 = vmatpush.msra.mxu0 0.0
    %339 = vmatpush.msra.mxu0 0.0
    %340 = vmatpush.msra.mxu0 0.0
    %341 = vmatpush.msra.mxu0 0.0
    %342 = vmatpush.msra.mxu0 0.0
    %343 = vmatpush.msra.mxu0 0.0
    %344 = vmatpush.msra.mxu0 0.0
    %345 = vmatpush.msra.mxu0 0.0
    %346 = vmatpush.msra.mxu0 0.0
    %347 = vmatpush.msra.mxu0 0.0
    %348 = vmatpush.msra.mxu0 0.0
    %349 = vmatpush.msra.mxu0 0.0
    %350 = vmatpush.msra.mxu0 0.0
    %351 = vmatpush.msra.mxu0 0.0
    %352 = vmatpush.msra.mxu0 %v335
    %353 = vmatpush.msra.mxu0 %v333
    %354 = vmatmul.f32.gmra.mxu0 %v74
    %v355 = vpop.f32.mrf.mxu0
    %v356 = vadd.f32 0.0, %v355
    %357 = vmatmul.f32.gmra.mxu0 %v76
    %v358 = vpop.f32.mrf.mxu0
    %v359 = vadd.f32 0.0, %v358
    %360 = vdwg.mxu0
    %363 = vrot.lane.b32.xlu0 %v356, 6
    %v364 = vpop.permute.xlu0 %363
    %365 = vrot.lane.b32.xlu0 %v359, 6
    %v366 = vpop.permute.xlu0 %365
    %v369 = vadd.f32 %v62, %v364
    %v370 = vadd.f32 %v63, %v366
    %v371 = vtanh.pop %v369
    %v372 = vtanh.pop %v370
    %vm373 = vcmask 56368
    %374 = vst.msk [vmem:[#allocation2] sm:$0xff] %vm373, %v371
    %375 = vst.msk [vmem:[#allocation2 + $0x8] sm:$0xff] %vm373, %v372
    %378 = vrot.lane.b32.xlu0 %v371, 122
    %v379 = vpop.permute.xlu0 %378
    %380 = vrot.lane.b32.xlu0 %v372, 122
    %v381 = vpop.permute.xlu0 %380
    %384 = vmatpush.msra.mxu0 0.0
    %385 = vmatpush.msra.mxu0 0.0
    %386 = vmatpush.msra.mxu0 0.0
    %387 = vmatpush.msra.mxu0 0.0
    %388 = vmatpush.msra.mxu0 0.0
    %389 = vmatpush.msra.mxu0 0.0
    %390 = vmatpush.msra.mxu0 0.0
    %391 = vmatpush.msra.mxu0 0.0
    %392 = vmatpush.msra.mxu0 0.0
    %393 = vmatpush.msra.mxu0 0.0
    %394 = vmatpush.msra.mxu0 0.0
    %395 = vmatpush.msra.mxu0 0.0
    %396 = vmatpush.msra.mxu0 0.0
    %397 = vmatpush.msra.mxu0 0.0
    %398 = vmatpush.msra.mxu0 %v381
    %399 = vmatpush.msra.mxu0 %v379
    %400 = vmatmul.f32.gmra.mxu0 %v74
    %v401 = vpop.f32.mrf.mxu0
    %v402 = vadd.f32 0.0, %v401
    %403 = vmatmul.f32.gmra.mxu0 %v76
    %v404 = vpop.f32.mrf.mxu0
    %v405 = vadd.f32 0.0, %v404
    %406 = vdwg.mxu0
    %409 = vrot.lane.b32.xlu0 %v402, 7
    %v410 = vpop.permute.xlu0 %409
    %411 = vrot.lane.b32.xlu0 %v405, 7
    %v412 = vpop.permute.xlu0 %411
    %v415 = vadd.f32 %v62, %v410
    %v416 = vadd.f32 %v63, %v412
    %v417 = vtanh.pop %v415
    %v418 = vtanh.pop %v416
    %vm419 = vcmask 64568
    %420 = vst.msk [vmem:[#allocation2] sm:$0xff] %vm419, %v417
    %421 = vst.msk [vmem:[#allocation2 + $0x8] sm:$0xff] %vm419, %v418
    %424 = vrot.lane.b32.xlu0 %v417, 121
    %v425 = vpop.permute.xlu0 %424
    %426 = vrot.lane.b32.xlu0 %v418, 121
    %v427 = vpop.permute.xlu0 %426
    %430 = vst.msk [vmem:[%s4] sm:$0xff] %vm105, %v425
    %431 = vst.msk [vmem:[%s4 + $0x8] sm:$0xff] %vm105, %v427
    %v432 = vld [vmem:[#allocation2] sm:$0xff]
    %v433 = vld [vmem:[#allocation2 + $0x8] sm:$0xff]
    %v434 = vstv %s37
    %436 = vrot.lane.b32.xlu0 %v36, 109
    %v437 = vpop.permute.xlu0 %436
    %v438 = vsel %vm73, %v437, 0
    %440 = vmatpush.msra.mxu0 0.0
    %441 = vmatpush.msra.mxu0 0.0
    %442 = vmatpush.msra.mxu0 0.0
    %443 = vmatpush.msra.mxu0 0.0
    %444 = vmatpush.msra.mxu0 0.0
    %445 = vmatpush.msra.mxu0 0.0
    %446 = vmatpush.msra.mxu0 0.0
    %447 = vmatpush.msra.mxu0 0.0
    %448 = vmatpush.msra.mxu0 0.0
    %449 = vmatpush.msra.mxu0 0.0
    %450 = vmatpush.msra.mxu0 0.0
    %451 = vmatpush.msra.mxu0 0.0
    %452 = vmatpush.msra.mxu0 0.0
    %453 = vmatpush.msra.mxu0 0.0
    %454 = vmatpush.msra.mxu0 %v433
    %455 = vmatpush.msra.mxu0 %v432
    %456 = vmatmul.f32.gmra.mxu0 %v438
    %v457 = vpop.f32.mrf.mxu0
    %v458 = vadd.f32 %v434, %v457
    %459 = vdwg.mxu0
    %460 = vst [vmem:[#allocation7] sm:$0x1] %v458
    // Predicated region
    $region18: #{tpu_custom_call.1} parent=1 // pred_check
      _
    $region19: #{tpu_custom_call.1} parent=1 // pred_check_branch
      %462 = sbr.rel (0) target = $region21
    $region20: #{tpu_custom_call.1} parent=1 // pred_region
      %464 = vsyncadd [#allocation6], 0
      %s466 = sshll.u32 [#allocation7], 4
      %s467 = int_to_ptr.vmem [resolvable:$true] %s466
      %s468 = sshll.u32 %s3, 4
      %s469 = int_to_ptr.hbm [resolvable:$true] %s468
      %471 = dma.vmem_to_hbm [thread:$0]  %s467, 16, %s469, [#allocation6]
    $region21: #{tpu_custom_call.1} parent=1 // pred_fallthru
      _
    // Predicated region
    $region22: #{tpu_custom_call.1} parent=1 // pred_check
      _
    $region23: #{tpu_custom_call.1} parent=1 // pred_check_branch
      %473 = sbr.rel (0) target = $region25
    $region24: #{tpu_custom_call.1} parent=1 // pred_region
      _
    $region25: #{tpu_custom_call.1} parent=1 // pred_fallthru
      _
    // Predicated region
    $region26: #{tpu_custom_call.1} parent=1 // pred_check
      _
    $region27: #{tpu_custom_call.1} parent=1 // pred_check_branch
      %475 = sbr.rel (0) target = $region29
    $region28: #{tpu_custom_call.1} parent=1 // pred_region
      %477 = dma.done [#allocation6], 16
    $region29: #{tpu_custom_call.1} parent=1 // pred_fallthru
      _
    // Predicated region
    $region30: #{tpu_custom_call.1} parent=1 // pred_check
      _
    $region31: #{tpu_custom_call.1} parent=1 // pred_check_branch
      %479 = sbr.rel (0) target = $region33
    $region32: #{tpu_custom_call.1} parent=1 // pred_region
      _
    $region33: #{tpu_custom_call.1} parent=1 // pred_fallthru
      _
    %480 = vsyncpa [#allocation5], 1
    %481 = vsyncpa [#allocation6], 1

</llo_original>
